<compile_context>
chip_gen: v5e
topology: v5e:2x2
jax: 0.10.0
libtpu: 0.0.40
codegen_flags: <defaults>
</compile_context>

<pallas_src>
import functools

import jax
import jax.numpy as jnp
from jax.experimental import pallas as pl
from jax.experimental.pallas import tpu as pltpu

_SUBLANE = 8


def _lbq_kernel(x_ref, rand_ref, out_ref, *, region_num: int, rows_chunk: int):
    """One row-tile of LBQ.

    x_ref:    (TR, HW)   f32 pixels
    rand_ref: (TR, R-1)  f32 uniform [0,1) split fractions
    out_ref:  (TR, HW)   f32 quantized pixels (lower boundary of region)
    """
    n_chunks = x_ref.shape[0] // rows_chunk

    @pl.loop(0, n_chunks)
    def _(ci):
        r0 = pl.multiple_of(ci * rows_chunk, rows_chunk)
        x = x_ref[pl.ds(r0, rows_chunk), :]          # (rc, hw)
        r = rand_ref[pl.ds(r0, rows_chunk), :]       # (rc, R-1)

        # Per-row (per-channel) min / max over all pixels of the chunk's rows
        # (chunks hold complete rows, so these are the true row min/max).
        mn = jnp.min(x, axis=1, keepdims=True)       # (rc, 1)
        mx = jnp.max(x, axis=1, keepdims=True)       # (rc, 1)

        # splits = rand * (max - min) + min  (unsorted, exactly like torch)
        splits = r * (mx - mn) + mn                  # (rc, R-1)

        # Region boundaries mirror torch:
        #   left  = [mn, s0, ..., s_{R-2}]
        #   right = [s0, ..., s_{R-2}, mx + 1e-6]
        # torch snaps each pixel to left[ri] of the FIRST region containing
        # it (argmax over the int mask); the all-False default is region 0
        # -> mn.  Reverse iteration with unconditional selects preserves
        # first-hit semantics (region 0 is applied last and wins).
        # Boundary compares are shared between adjacent regions:
        #   mask_i = ge_i & ~ge_{i+1},   ge_i = (x >= boundary_i).
        ge_hi = x >= (mx + 1e-6)                     # ge_R
        out = None
        for i in range(region_num - 1, 0, -1):       # regions R-1 .. 1
            left = splits[:, i - 1:i]                 # (rc, 1)
            ge_lo = x >= left                         # ge_i
            hit = jnp.logical_and(ge_lo, jnp.logical_not(ge_hi))
            out = jnp.where(hit, left, mn if out is None else out)
            ge_hi = ge_lo
        # Region 0: mask_0 = ge_0 & ~ge_1 = ~ge_1 (x >= mn always); write the
        # final select directly into the output block slice.
        out_ref[pl.ds(r0, rows_chunk), :] = jnp.where(ge_hi, out, mn)


def _vmem_budget() -> tuple[int, int]:
    """(target_block_bytes, vmem_limit_bytes) based on the chip's VMEM size."""
    phys = 64 * 1024 * 1024                      # conservative default (v7x-class)
    try:
        phys = int(pltpu.get_tpu_info().vmem_capacity_bytes)
    except Exception:
        pass
    if phys >= 100 * 1024 * 1024:                # v5e / v6e: 128 MiB physical
        return 8 * 1024 * 1024, 96 * 1024 * 1024
    return 4 * 1024 * 1024, 48 * 1024 * 1024     # v7x: 64 MiB physical


def lbq_forward(x: jax.Array, key: jax.Array, region_num: int) -> jax.Array:
    """LBQ forward.  x: (b, c, h, w), NCHW (is_channels_first=False path)."""
    assert region_num >= 2, "LBQ needs at least 2 regions"
    b, c, h, w = x.shape
    bc, hw = b * c, h * w
    xf = x.reshape(bc, hw).astype(jnp.float32)

    # torch.rand(total_splits).view(-1, region_num - 1) equivalent
    # (distributionally; jax.random does not reproduce torch's bit stream).
    rand = jax.random.uniform(key, (bc, region_num - 1), dtype=jnp.float32)

    target_block_bytes, vmem_limit = _vmem_budget()

    if bc < _SUBLANE:
        tr = bc                                   # full-dim block (exempt from 8-row rule)
    else:
        rows_ceil = pl.cdiv(bc, _SUBLANE) * _SUBLANE
        tr = max(_SUBLANE,
                 (target_block_bytes // (hw * 4)) // _SUBLANE * _SUBLANE)
        tr = min(tr, rows_ceil)
        # Keep >= 2 grid steps when there are enough rows (v7x: 2 TensorCores).
        if rows_ceil >= 2 * _SUBLANE:
            tr = min(tr, pl.cdiv(pl.cdiv(bc, 2), _SUBLANE) * _SUBLANE)
    rows_chunk = min(_SUBLANE, tr)

    grid = (pl.cdiv(bc, tr),)
    # TODO(synk): for very large h*w (an 8-row block approaching ~1/4 of the
    # VMEM limit) add a lane-axis grid split with a two-pass min/max +
    # quantize scheme; not needed for typical image sizes.

    out = pl.pallas_call(
        functools.partial(_lbq_kernel, region_num=region_num,
                          rows_chunk=rows_chunk),
        out_shape=jax.ShapeDtypeStruct((bc, hw), jnp.float32),
        grid=grid,
        in_specs=[
            pl.BlockSpec((tr, hw), lambda i: (i, 0)),
            # rand tile for this row block (a few KB; DMA hidden by pipeline).
            pl.BlockSpec((tr, region_num - 1), lambda i: (i, 0)),
        ],
        out_specs=pl.BlockSpec((tr, hw), lambda i: (i, 0)),
        compiler_params=pltpu.CompilerParams(
            dimension_semantics=("parallel",),
            vmem_limit_bytes=vmem_limit,
        ),
    )(xf, rand)

    return out.reshape(b, c, h, w).astype(x.dtype)


def lbq_reference(x: jax.Array, rand: jax.Array, region_num: int) -> jax.Array:
    """Pure-JAX reference mirroring the torch code exactly."""
    b, c, h, w = x.shape
    xf = x.reshape(b * c, h * w).astype(jnp.float32)
    mn = xf.min(axis=1, keepdims=True)
    mx = xf.max(axis=1, keepdims=True)
    splits = rand * (mx - mn) + mn                           # (bc, R-1)
    left = jnp.concatenate([mn, splits], axis=1)             # (bc, R)
    right = jnp.concatenate([splits, mx + 1e-6], axis=1)     # (bc, R)
    xe = xf[:, None, :]                                      # (bc, 1, hw)
    mask = (xe >= left[:, :, None]) & (xe < right[:, :, None])
    idx = jnp.argmax(mask.astype(jnp.int32), axis=1)         # (bc, hw) first True
    quant = jnp.take_along_axis(left, idx, axis=1)           # (bc, hw)
    return quant.reshape(b, c, h, w)


if __name__ == "__main__":
    region_num = 4
    b, c, h, w = 2, 4, 16, 16

    key = jax.random.PRNGKey(0)
    kx, kr = jax.random.split(key)
    x = jax.random.normal(kx, (b, c, h, w), dtype=jnp.float32)

    out = lbq_forward(x, kr, region_num)
    out = jax.block_until_ready(out)

    # Sanity check against the pure-JAX reference using the same random
    # splits (jax.random.uniform is deterministic for a given key/shape).
    rand = jax.random.uniform(kr, (b * c, region_num - 1), dtype=jnp.float32)
    ref = lbq_reference(x, rand, region_num)
    assert out.shape == (b, c, h, w)
    assert jnp.allclose(out, ref, atol=1e-5), "Pallas LBQ mismatch vs reference"

    print("KERNEL_OK")
</pallas_src>

<mosaic_0001>
module attributes {stable_mosaic.version = 11 : i64} {
  func.func @_lbq_kernel(%arg0: i32, %arg1: memref<8x256xf32, #tpu.memory_space<vmem>>, %arg2: memref<8x3xf32, #tpu.memory_space<vmem>>, %arg3: memref<8x256xf32, #tpu.memory_space<vmem>>) attributes {dimension_semantics = [#tpu.dimension_semantics<parallel>], iteration_bounds = array<i64: 1>, scalar_prefetch = 0 : i64, scratch_operands = 0 : i64, tpu.core_type = #tpu.core_type<tc>, window_params = [{transform_indices = @transform_0, window_bounds = array<i64: 8, 256>}, {transform_indices = @transform_1, window_bounds = array<i64: 8, 3>}, {transform_indices = @transform_2, window_bounds = array<i64: 8, 256>}]} {
    %c0_i32 = arith.constant 0 : i32
    %c1_i32 = arith.constant 1 : i32
    %0 = arith.muli %c0_i32, %c1_i32 : i32
    %c0_i32_0 = arith.constant 0 : i32
    %1 = arith.addi %c0_i32_0, %0 : i32
    %c8_i32 = arith.constant 8 : i32
    %2 = arith.muli %1, %c8_i32 : i32
    %3 = tpu.assume_multiple %2, 8 : i32
    %4 = arith.index_cast %3 : i32 to index
    %c0 = arith.constant 0 : index
    %5 = vector.load %arg1[%4, %c0] : memref<8x256xf32, #tpu.memory_space<vmem>>, vector<8x256xf32>
    %6 = arith.index_cast %3 : i32 to index
    %c0_1 = arith.constant 0 : index
    %7 = vector.load %arg2[%6, %c0_1] : memref<8x3xf32, #tpu.memory_space<vmem>>, vector<8x3xf32>
    %cst = arith.constant dense<0x7F800000> : vector<8xf32>
    %8 = vector.multi_reduction <minimumf>, %5, %cst [1] : vector<8x256xf32> to vector<8xf32>
    %9 = vector.shape_cast %8 : vector<8xf32> to vector<8x1xf32>
    %cst_2 = arith.constant dense<0xFF800000> : vector<8xf32>
    %10 = vector.multi_reduction <maximumf>, %5, %cst_2 [1] : vector<8x256xf32> to vector<8xf32>
    %11 = vector.shape_cast %10 : vector<8xf32> to vector<8x1xf32>
    %12 = arith.subf %11, %9 : vector<8x1xf32>
    %13 = vector.broadcast %12 : vector<8x1xf32> to vector<8x3xf32>
    %14 = arith.mulf %7, %13 : vector<8x3xf32>
    %15 = vector.broadcast %9 : vector<8x1xf32> to vector<8x3xf32>
    %16 = arith.addf %14, %15 : vector<8x3xf32>
    %cst_3 = arith.constant 9.99999997E-7 : f32
    %17 = vector.broadcast %cst_3 : f32 to vector<8x1xf32>
    %18 = arith.addf %11, %17 : vector<8x1xf32>
    %19 = vector.broadcast %18 : vector<8x1xf32> to vector<8x256xf32>
    %20 = arith.cmpf oge, %5, %19 : vector<8x256xf32>
    %21 = vector.extract_strided_slice %16 {offsets = [0, 2], sizes = [8, 1], strides = [1, 1]} : vector<8x3xf32> to vector<8x1xf32>
    %22 = vector.broadcast %21 : vector<8x1xf32> to vector<8x256xf32>
    %23 = arith.cmpf oge, %5, %22 : vector<8x256xf32>
    %cst_4 = arith.constant dense<true> : vector<8x256xi1>
    %24 = arith.xori %20, %cst_4 : vector<8x256xi1>
    %25 = arith.andi %23, %24 : vector<8x256xi1>
    %26 = vector.shape_cast %21 : vector<8x1xf32> to vector<8x1xf32>
    %27 = vector.broadcast %26 : vector<8x1xf32> to vector<8x256xf32>
    %28 = vector.shape_cast %9 : vector<8x1xf32> to vector<8x1xf32>
    %29 = vector.broadcast %28 : vector<8x1xf32> to vector<8x256xf32>
    %30 = arith.select %25, %27, %29 : vector<8x256xi1>, vector<8x256xf32>
    %31 = vector.extract_strided_slice %16 {offsets = [0, 1], sizes = [8, 1], strides = [1, 1]} : vector<8x3xf32> to vector<8x1xf32>
    %32 = vector.broadcast %31 : vector<8x1xf32> to vector<8x256xf32>
    %33 = arith.cmpf oge, %5, %32 : vector<8x256xf32>
    %cst_5 = arith.constant dense<true> : vector<8x256xi1>
    %34 = arith.xori %23, %cst_5 : vector<8x256xi1>
    %35 = arith.andi %33, %34 : vector<8x256xi1>
    %36 = vector.shape_cast %31 : vector<8x1xf32> to vector<8x1xf32>
    %37 = vector.broadcast %36 : vector<8x1xf32> to vector<8x256xf32>
    %38 = arith.select %35, %37, %30 : vector<8x256xi1>, vector<8x256xf32>
    %39 = vector.extract_strided_slice %16 {offsets = [0, 0], sizes = [8, 1], strides = [1, 1]} : vector<8x3xf32> to vector<8x1xf32>
    %40 = vector.broadcast %39 : vector<8x1xf32> to vector<8x256xf32>
    %41 = arith.cmpf oge, %5, %40 : vector<8x256xf32>
    %cst_6 = arith.constant dense<true> : vector<8x256xi1>
    %42 = arith.xori %33, %cst_6 : vector<8x256xi1>
    %43 = arith.andi %41, %42 : vector<8x256xi1>
    %44 = vector.shape_cast %39 : vector<8x1xf32> to vector<8x1xf32>
    %45 = vector.broadcast %44 : vector<8x1xf32> to vector<8x256xf32>
    %46 = arith.select %43, %45, %38 : vector<8x256xi1>, vector<8x256xf32>
    %47 = vector.shape_cast %9 : vector<8x1xf32> to vector<8x1xf32>
    %48 = vector.broadcast %47 : vector<8x1xf32> to vector<8x256xf32>
    %49 = arith.select %41, %46, %48 : vector<8x256xi1>, vector<8x256xf32>
    %50 = arith.index_cast %3 : i32 to index
    %c0_7 = arith.constant 0 : index
    %51 = vector.load %arg3[%50, %c0_7] : memref<8x256xf32, #tpu.memory_space<vmem>>, vector<8x256xf32>
    tpu.vector_store %arg3[%50, %c0_7], %49 {strides = array<i32>} : memref<8x256xf32, #tpu.memory_space<vmem>>, vector<8x256xf32>,
    %c1_i32_8 = arith.constant 1 : i32
    return
  }
  func.func @transform_0(%arg0: i32) -> (i32, i32) {
    %c0_i32 = arith.constant 0 : i32
    %c0_i32_0 = arith.constant 0 : i32
    return %arg0, %c0_i32 : i32, i32
  }
  func.func @transform_1(%arg0: i32) -> (i32, i32) {
    %c0_i32 = arith.constant 0 : i32
    %c0_i32_0 = arith.constant 0 : i32
    return %arg0, %c0_i32 : i32, i32
  }
  func.func @transform_2(%arg0: i32) -> (i32, i32) {
    %c0_i32 = arith.constant 0 : i32
    %c0_i32_0 = arith.constant 0 : i32
    return %arg0, %c0_i32 : i32, i32
  }
}

</mosaic_0001>

<llo_original>
// kernel: tpu_custom_call.1
$region0: #{tpu_custom_call.1}
  #allocation0 [shape = 'u32[]', space=smem, size = 0x4, offset = 0x4, fixed_abs, tag = 'smem constant byte address 0x4 - core index']
  #allocation1 [shape = 'u32[72,128]{1,0:T(1,128)}', space=vmem, size = 0x9000, scoped, tag = 'internal scratch']
  %s0 = inlined_call_operand.hbm [shape: f32[8,256], index: 0, kind: input, shape index: {}]
  %s1 = inlined_call_operand.vmem [shape: f32[8,3], index: 1, kind: input, shape index: {}]
  %s2 = inlined_call_operand.hbm [shape: f32[8,256], index: 2, kind: output, shape index: {}]
  %s3 = sld [smem:[#allocation0]]
  $region22: #{tpu_custom_call.1} parent=0
    _
  %s5 = ssub.s32 1, %s3
  %s6 = scalar_select 0, %s5, %s3
  $region1: #{tpu_custom_call.1} parent=0
    #allocation2 [shape = 'u8[8192]{0}', space=vmem, size = 0x2000, scoped, tag = 'input window, operand 0, single buffered']
    #allocation3 [shape = 's32[1]{0}', space=sflag, size = 0x4, scoped, tag = 'scoped memory for tpu_custom_call.1']
    #allocation4 [shape = 's32[1]{0}', space=sflag, size = 0x4, scoped, tag = 'scoped memory for tpu_custom_call.1']
    #allocation5 [shape = 'u8[8192]{0}', space=vmem, size = 0x2000, scoped, tag = 'output window, operand 0, single buffered']
    %7 = vsyncpa [#allocation3], 0
    %8 = vsyncpa [#allocation4], 0
    // Predicated region
    $region2: #{tpu_custom_call.1} parent=1 // pred_check
      _
    $region3: #{tpu_custom_call.1} parent=1 // pred_check_branch
      %10 = sbr.rel (0) target = $region5
    $region4: #{tpu_custom_call.1} parent=1 // pred_region
      %12 = vsyncadd [#allocation3], 0
      %s14 = sshll.u32 %s0, 4
      %s15 = int_to_ptr.hbm [resolvable:$true] %s14
      %s16 = sshll.u32 [#allocation2], 4
      %s17 = int_to_ptr.vmem [resolvable:$true] %s16
      %19 = dma.hbm_to_vmem [thread:$0]  %s15, 256, %s17, [#allocation3]
    $region5: #{tpu_custom_call.1} parent=1 // pred_fallthru
      _
    // Predicated region
    $region6: #{tpu_custom_call.1} parent=1 // pred_check
      _
    $region7: #{tpu_custom_call.1} parent=1 // pred_check_branch
      %21 = sbr.rel (0) target = $region9
    $region8: #{tpu_custom_call.1} parent=1 // pred_region
      _
    $region9: #{tpu_custom_call.1} parent=1 // pred_fallthru
      _
    // Predicated region
    $region10: #{tpu_custom_call.1} parent=1 // pred_check
      _
    $region11: #{tpu_custom_call.1} parent=1 // pred_check_branch
      %23 = sbr.rel (0) target = $region13
    $region12: #{tpu_custom_call.1} parent=1 // pred_region
      %25 = dma.done [#allocation3], 256
    $region13: #{tpu_custom_call.1} parent=1 // pred_fallthru
      _
    %s26 = smul.u32 0, 2
    %s27 = smul.addr %s26, 8
    %s28 = scalar_lea.vmem [#allocation2], %s27
    %v29 = vld [vmem:[%s28] sm:$0xff]
    %v30 = vld [vmem:[%s28 + $0x8] sm:$0xff]
    %v31 = vld [vmem:[%s1] sm:$0xff]
    %v32 = vmin.f32 %v29, %v30
    %33 = vmin.xlane.f32.xlu0 %v32
    %v34 = vpop.xlane.xlu0 %33
    %v35 = vmax.f32 %v29, %v30
    %36 = vmax.xlane.f32.xlu0 %v35
    %v37 = vpop.xlane.xlu0 %36
    %v38 = vsub.f32 %v37, %v34
    %v39 = vmul.f32 %v31, %v38
    %v40 = vadd.f32 %v39, %v34
    %v41 = vadd.f32 %v37, 1e-06
    %vm42 = vcmp.ge.f32.partialorder %v29, %v41
    %vm43 = vcmp.ge.f32.partialorder %v30, %v41
    %45 = vset.pattern.permute.xlu0 2
    %46 = vperm.xlu0 %45, %v40
    %v47 = vpop.permute.xlu0 %46
    %vm49 = vcmp.ge.f32.partialorder %v29, %v47
    %vm50 = vcmp.ge.f32.partialorder %v30, %v47
    %vm51 = vmxor %vm42, 1
    %vm52 = vmxor %vm43, 1
    %vm53 = vmand %vm49, %vm51
    %vm54 = vmand %vm50, %vm52
    %v55 = vsel %vm53, %v47, %v34
    %v56 = vsel %vm54, %v47, %v34
    %57 = vset.pattern.permute.xlu0 1
    %58 = vperm.xlu0 %57, %v40
    %v59 = vpop.permute.xlu0 %58
    %vm61 = vcmp.ge.f32.partialorder %v29, %v59
    %vm62 = vcmp.ge.f32.partialorder %v30, %v59
    %vm63 = vmxor %vm49, 1
    %vm64 = vmxor %vm50, 1
    %vm65 = vmand %vm61, %vm63
    %vm66 = vmand %vm62, %vm64
    %v67 = vsel %vm65, %v59, %v55
    %v68 = vsel %vm66, %v59, %v56
    %69 = vset.pattern.permute.xlu0 0
    %70 = vperm.xlu0 %69, %v40
    %v71 = vpop.permute.xlu0 %70
    %vm73 = vcmp.ge.f32.partialorder %v29, %v71
    %vm74 = vcmp.ge.f32.partialorder %v30, %v71
    %vm75 = vmxor %vm61, 1
    %vm76 = vmxor %vm62, 1
    %vm77 = vmand %vm73, %vm75
    %vm78 = vmand %vm74, %vm76
    %v79 = vsel %vm77, %v71, %v67
    %v80 = vsel %vm78, %v71, %v68
    %v81 = vsel %vm73, %v79, %v34
    %v82 = vsel %vm74, %v80, %v34
    %s83 = smul.addr %s26, 8
    %s84 = scalar_lea.vmem [#allocation5], %s83
    %85 = vst [vmem:[%s84] sm:$0xff] %v81
    %86 = vst [vmem:[%s84 + $0x8] sm:$0xff] %v82
    // Predicated region
    $region14: #{tpu_custom_call.1} parent=1 // pred_check
      _
    $region15: #{tpu_custom_call.1} parent=1 // pred_check_branch
      %88 = sbr.rel (0) target = $region17
    $region16: #{tpu_custom_call.1} parent=1 // pred_region
      %90 = vsyncadd [#allocation4], 0
      %s92 = sshll.u32 [#allocation5], 4
      %s93 = int_to_ptr.vmem [resolvable:$true] %s92
      %s94 = sshll.u32 %s2, 4
      %s95 = int_to_ptr.hbm [resolvable:$true] %s94
      %97 = dma.vmem_to_hbm [thread:$0]  %s93, 256, %s95, [#allocation4]
    $region17: #{tpu_custom_call.1} parent=1 // pred_fallthru
      _
    // Predicated region
    $region18: #{tpu_custom_call.1} parent=1 // pred_check
      _
    $region19: #{tpu_custom_call.1} parent=1 // pred_check_branch
      %99 = sbr.rel (0) target = $region21
    $region20: #{tpu_custom_call.1} parent=1 // pred_region
      %101 = dma.done [#allocation4], 256
    $region21: #{tpu_custom_call.1} parent=1 // pred_fallthru
      _
    %102 = vsyncpa [#allocation3], 1
    %103 = vsyncpa [#allocation4], 1

</llo_original>
